<compile_context>
chip_gen: v7x
topology: tpu7x:2x2x1
jax: 0.10.0
libtpu: 0.0.40
codegen_flags: <defaults>
</compile_context>

<pallas_src>
import functools

import jax
import jax.numpy as jnp
from jax.experimental import pallas as pl
from jax.experimental.pallas import tpu as pltpu


def _round_up(x, m):
    return ((x + m - 1) // m) * m


def _review_kernel(params_ref, pre_ref, ilo_dm_ref, ihi_dm_ref, ilo_pm_ref,
                   ihi_pm_ref, dmask_ref, pmask_ref, out_ref):
    # params (SMEM, f32[6]): [low_d, low_p, high_d, high_p, minus_w, plus_w]
    low_d = params_ref[0]
    low_p = params_ref[1]
    high_d = params_ref[2]
    high_p = params_ref[3]
    minus_w = params_ref[4]
    plus_w = params_ref[5]

    # Masks arrive f32 (layout-friendly), cast to bf16 for the MXU (tiny tiles).
    dmask = dmask_ref[...].astype(jnp.bfloat16)   # [TB, D] 0/1
    pmask = pmask_ref[...].astype(jnp.bfloat16)   # [TB, P] 0/1

    # MXU: per (patient, med), count active codes whose effect clears the
    # threshold.  bf16 x bf16 with f32 accumulation -> counts are exact.
    cnt_lo_d = jnp.dot(dmask, ilo_dm_ref[...], preferred_element_type=jnp.float32)
    cnt_hi_d = jnp.dot(dmask, ihi_dm_ref[...], preferred_element_type=jnp.float32)
    cnt_lo_p = jnp.dot(pmask, ilo_pm_ref[...], preferred_element_type=jnp.float32)
    cnt_hi_p = jnp.dot(pmask, ihi_pm_ref[...], preferred_element_type=jnp.float32)

    # The PyTorch running max starts at 0.0.  Fold that implicit candidate in
    # as a scalar count correction so the tests stay exact even for
    # non-positive thresholds (a no-op for the usual positive thresholds).
    cnt_lo_d = cnt_lo_d + jnp.where(low_d <= 0.0, 1.0, 0.0)
    cnt_lo_p = cnt_lo_p + jnp.where(low_p <= 0.0, 1.0, 0.0)
    cnt_hi_d = cnt_hi_d + jnp.where(high_d < 0.0, 1.0, 0.0)
    cnt_hi_p = cnt_hi_p + jnp.where(high_p < 0.0, 1.0, 0.0)

    # max_cdm < low_d  <=>  cnt_lo_d == 0   (complement of a strict compare)
    # max_cdm > high_d <=>  cnt_hi_d > 0
    cond_low = (cnt_lo_d == 0.0) & (cnt_lo_p == 0.0)
    cond_high = (cnt_hi_d > 0.0) | (cnt_hi_p > 0.0)
    delta = jnp.where(cond_low, -minus_w, jnp.where(cond_high, plus_w, 0.0))

    out_ref[...] = (pre_ref[...].astype(jnp.float32) + delta).astype(out_ref.dtype)


@functools.partial(jax.jit, static_argnames=("tile_m", "tile_b"))
def causality_review(pre_prob, effect_dm, effect_pm, diag_mask, proc_mask,
                     c1_low_limit, c1_high_limit, c1_minus_weight,
                     c1_plus_weight, *, tile_m=512, tile_b=8):
    """pre_prob: [B, M]; effect_dm: [D, M]; effect_pm: [P, M];
    diag_mask: [B, D] 0/1; proc_mask: [B, P] 0/1; limits: [2]; weights: scalar."""
    B, M = pre_prob.shape
    D = effect_dm.shape[0]
    P = effect_pm.shape[0]

    low_d = c1_low_limit[0].astype(jnp.float32)
    low_p = c1_low_limit[1].astype(jnp.float32)
    high_d = c1_high_limit[0].astype(jnp.float32)
    high_p = c1_high_limit[1].astype(jnp.float32)

    # Threshold-indicator matrices (0/1), bf16 so they feed the MXU directly
    # on every generation (v7x has no integer MXU).
    edm = effect_dm.astype(jnp.float32)
    epm = effect_pm.astype(jnp.float32)
    ilo_dm = (edm >= low_d).astype(jnp.bfloat16)
    ihi_dm = (edm > high_d).astype(jnp.bfloat16)
    ilo_pm = (epm >= low_p).astype(jnp.bfloat16)
    ihi_pm = (epm > high_p).astype(jnp.bfloat16)

    # Lane-aligned med tiling; sublane-dense batch tiling.
    assert tile_m % 128 == 0, "tile_m must be lane-aligned"
    tile_m = min(tile_m, _round_up(M, 128))
    M_pad = _round_up(M, tile_m)
    tile_b = max(8, min(tile_b, _round_up(B, 8)))
    B_pad = _round_up(B, tile_b)

    def pad2(x, rows, cols):
        pr, pc = rows - x.shape[0], cols - x.shape[1]
        if pr or pc:
            x = jnp.pad(x, ((0, pr), (0, pc)))
        return x

    pre_p = pad2(pre_prob.astype(jnp.float32), B_pad, M_pad)
    ilo_dm = pad2(ilo_dm, D, M_pad)
    ihi_dm = pad2(ihi_dm, D, M_pad)
    ilo_pm = pad2(ilo_pm, P, M_pad)
    ihi_pm = pad2(ihi_pm, P, M_pad)
    dmask = pad2(diag_mask.astype(jnp.float32), B_pad, D)
    pmask = pad2(proc_mask.astype(jnp.float32), B_pad, P)

    # Coalesce all scalar parameters into a single SMEM vector.
    params = jnp.stack([
        low_d, low_p, high_d, high_p,
        jnp.asarray(c1_minus_weight, jnp.float32).reshape(()),
        jnp.asarray(c1_plus_weight, jnp.float32).reshape(()),
    ])

    nm = M_pad // tile_m
    nb = B_pad // tile_b

    smem = pl.BlockSpec(memory_space=pltpu.MemorySpace.SMEM)

    # Grid: (m-tile, batch-tile).  Batch iterates innermost and the indicator
    # BlockSpecs are constant in b -> each indicator m-tile is DMA'd once and
    # stays VMEM-resident across the whole batch.
    out = pl.pallas_call(
        _review_kernel,
        out_shape=jax.ShapeDtypeStruct((B_pad, M_pad), pre_prob.dtype),
        grid=(nm, nb),
        in_specs=[
            smem,                                                  # params
            pl.BlockSpec((tile_b, tile_m), lambda j, b: (b, j)),   # pre_prob
            pl.BlockSpec((D, tile_m), lambda j, b: (0, j)),        # I_low  (Diag->Med)
            pl.BlockSpec((D, tile_m), lambda j, b: (0, j)),        # I_high (Diag->Med)
            pl.BlockSpec((P, tile_m), lambda j, b: (0, j)),        # I_low  (Proc->Med)
            pl.BlockSpec((P, tile_m), lambda j, b: (0, j)),        # I_high (Proc->Med)
            pl.BlockSpec((tile_b, D), lambda j, b: (b, 0)),        # diag_mask
            pl.BlockSpec((tile_b, P), lambda j, b: (b, 0)),        # proc_mask
        ],
        out_specs=pl.BlockSpec((tile_b, tile_m), lambda j, b: (b, j)),
        compiler_params=pltpu.CompilerParams(
            # Split the m-tile axis across v7x's two TensorCores; keep the
            # batch axis sequential so indicator tiles remain resident per core.
            dimension_semantics=("parallel", "arbitrary")),
    )(params, pre_p, ilo_dm, ihi_dm, ilo_pm, ihi_pm, dmask, pmask)

    return out[:B, :M]


def _reference(pre_prob, effect_dm, effect_pm, diag_lists, proc_lists,
               low, high, minus_w, plus_w):
    """Pure-JAX replica of the PyTorch double loop, per patient."""
    rows = []
    for b in range(pre_prob.shape[0]):
        max_cdm = jnp.maximum(
            jnp.max(effect_dm[jnp.asarray(diag_lists[b])], axis=0), 0.0)
        max_cpm = jnp.maximum(
            jnp.max(effect_pm[jnp.asarray(proc_lists[b])], axis=0), 0.0)
        cond_low = (max_cdm < low[0]) & (max_cpm < low[1])
        cond_high = (max_cdm > high[0]) | (max_cpm > high[1])
        delta = jnp.where(cond_low, -minus_w, jnp.where(cond_high, plus_w, 0.0))
        rows.append(pre_prob[b] + delta)
    return jnp.stack(rows, axis=0)


if __name__ == "__main__":
    batch, num_diag, num_proc, num_med = 4, 24, 16, 256

    key = jax.random.PRNGKey(0)
    k1, k2, k3 = jax.random.split(key, 3)

    # Deterministic synthetic causal-effect matrices (stand-ins for casual_graph).
    effect_dm = jax.random.uniform(k1, (num_diag, num_med), dtype=jnp.float32)
    effect_pm = jax.random.uniform(k2, (num_proc, num_med), dtype=jnp.float32)

    # Deterministic "learned" parameters (shapes match the nn.Parameters).
    c1_high_limit = jnp.array([0.9, 0.9], dtype=jnp.float32)   # [diag, proc]
    c1_low_limit = jnp.array([0.6, 0.6], dtype=jnp.float32)
    c1_minus_weight = jnp.array(0.05, dtype=jnp.float32)
    c1_plus_weight = jnp.array(0.05, dtype=jnp.float32)

    # A small batch of patients: predicted med probabilities + code sets.
    pre_prob = jax.random.uniform(k3, (batch, num_med), dtype=jnp.float32)
    diag_lists = [[1, 3, 5, 10], [0, 2, 23], [7, 8, 9, 11, 12], [4, 18]]
    proc_lists = [[0, 2, 7], [1, 15], [3, 4, 5], [6, 10, 14]]

    diag_mask = jnp.zeros((batch, num_diag), jnp.float32)
    proc_mask = jnp.zeros((batch, num_proc), jnp.float32)
    for b in range(batch):
        diag_mask = diag_mask.at[b, jnp.asarray(diag_lists[b])].set(1.0)
        proc_mask = proc_mask.at[b, jnp.asarray(proc_lists[b])].set(1.0)

    out = causality_review(pre_prob, effect_dm, effect_pm, diag_mask, proc_mask,
                           c1_low_limit, c1_high_limit, c1_minus_weight,
                           c1_plus_weight, tile_m=128, tile_b=8)
    out = jax.block_until_ready(out)

    ref = _reference(pre_prob, effect_dm, effect_pm, diag_lists, proc_lists,
                     c1_low_limit, c1_high_limit,
                     c1_minus_weight, c1_plus_weight)
    assert out.shape == (batch, num_med) and out.dtype == jnp.float32
    assert jnp.allclose(out, ref, atol=1e-6), "Pallas kernel mismatch vs reference"

    print("KERNEL_OK")
</pallas_src>

<mosaic_0001>
module attributes {stable_mosaic.version = 11 : i64} {
  func.func @_review_kernel(%arg0: i32, %arg1: i32, %arg2: memref<6xf32, #tpu.memory_space<smem>>, %arg3: memref<8x128xf32, #tpu.memory_space<vmem>>, %arg4: memref<24x128xbf16, #tpu.memory_space<vmem>>, %arg5: memref<24x128xbf16, #tpu.memory_space<vmem>>, %arg6: memref<16x128xbf16, #tpu.memory_space<vmem>>, %arg7: memref<16x128xbf16, #tpu.memory_space<vmem>>, %arg8: memref<8x24xf32, #tpu.memory_space<vmem>>, %arg9: memref<8x16xf32, #tpu.memory_space<vmem>>, %arg10: memref<8x128xf32, #tpu.memory_space<vmem>>) attributes {dimension_semantics = [#tpu.dimension_semantics<parallel>, #tpu.dimension_semantics<arbitrary>], iteration_bounds = array<i64: 2, 1>, scalar_prefetch = 0 : i64, scratch_operands = 0 : i64, tpu.core_type = #tpu.core_type<tc>, window_params = [{transform_indices = @transform_0, window_bounds = array<i64: 6>}, {transform_indices = @transform_1, window_bounds = array<i64: 8, 128>}, {transform_indices = @transform_2, window_bounds = array<i64: 24, 128>}, {transform_indices = @transform_3, window_bounds = array<i64: 24, 128>}, {transform_indices = @transform_4, window_bounds = array<i64: 16, 128>}, {transform_indices = @transform_5, window_bounds = array<i64: 16, 128>}, {transform_indices = @transform_6, window_bounds = array<i64: 8, 24>}, {transform_indices = @transform_7, window_bounds = array<i64: 8, 16>}, {transform_indices = @transform_8, window_bounds = array<i64: 8, 128>}]} {
    %c0 = arith.constant 0 : index
    %0 = memref.load %arg2[%c0] : memref<6xf32, #tpu.memory_space<smem>>
    %c1 = arith.constant 1 : index
    %1 = memref.load %arg2[%c1] : memref<6xf32, #tpu.memory_space<smem>>
    %c2 = arith.constant 2 : index
    %2 = memref.load %arg2[%c2] : memref<6xf32, #tpu.memory_space<smem>>
    %c3 = arith.constant 3 : index
    %3 = memref.load %arg2[%c3] : memref<6xf32, #tpu.memory_space<smem>>
    %c4 = arith.constant 4 : index
    %4 = memref.load %arg2[%c4] : memref<6xf32, #tpu.memory_space<smem>>
    %c5 = arith.constant 5 : index
    %5 = memref.load %arg2[%c5] : memref<6xf32, #tpu.memory_space<smem>>
    %c0_0 = arith.constant 0 : index
    %c0_1 = arith.constant 0 : index
    %6 = vector.load %arg8[%c0_0, %c0_1] : memref<8x24xf32, #tpu.memory_space<vmem>>, vector<8x24xf32>
    %7 = arith.truncf %6 : vector<8x24xf32> to vector<8x24xbf16>
    %c0_2 = arith.constant 0 : index
    %c0_3 = arith.constant 0 : index
    %8 = vector.load %arg9[%c0_2, %c0_3] : memref<8x16xf32, #tpu.memory_space<vmem>>, vector<8x16xf32>
    %9 = arith.truncf %8 : vector<8x16xf32> to vector<8x16xbf16>
    %c0_4 = arith.constant 0 : index
    %c0_5 = arith.constant 0 : index
    %10 = vector.load %arg4[%c0_4, %c0_5] : memref<24x128xbf16, #tpu.memory_space<vmem>>, vector<24x128xbf16>
    %cst = arith.constant dense<0.000000e+00> : vector<8x128xf32>
    %11 = tpu.matmul %7, %10, %cst {dimension_numbers = #tpu.dot_dimension_numbers<[1], [0], [0], [1], [0, 0, 1, 1], [], []>} : vector<8x24xbf16>, vector<24x128xbf16>, vector<8x128xf32> -> vector<8x128xf32>
    %c0_6 = arith.constant 0 : index
    %c0_7 = arith.constant 0 : index
    %12 = vector.load %arg5[%c0_6, %c0_7] : memref<24x128xbf16, #tpu.memory_space<vmem>>, vector<24x128xbf16>
    %cst_8 = arith.constant dense<0.000000e+00> : vector<8x128xf32>
    %13 = tpu.matmul %7, %12, %cst_8 {dimension_numbers = #tpu.dot_dimension_numbers<[1], [0], [0], [1], [0, 0, 1, 1], [], []>} : vector<8x24xbf16>, vector<24x128xbf16>, vector<8x128xf32> -> vector<8x128xf32>
    %c0_9 = arith.constant 0 : index
    %c0_10 = arith.constant 0 : index
    %14 = vector.load %arg6[%c0_9, %c0_10] : memref<16x128xbf16, #tpu.memory_space<vmem>>, vector<16x128xbf16>
    %cst_11 = arith.constant dense<0.000000e+00> : vector<8x128xf32>
    %15 = tpu.matmul %9, %14, %cst_11 {dimension_numbers = #tpu.dot_dimension_numbers<[1], [0], [0], [1], [0, 0, 1, 1], [], []>} : vector<8x16xbf16>, vector<16x128xbf16>, vector<8x128xf32> -> vector<8x128xf32>
    %c0_12 = arith.constant 0 : index
    %c0_13 = arith.constant 0 : index
    %16 = vector.load %arg7[%c0_12, %c0_13] : memref<16x128xbf16, #tpu.memory_space<vmem>>, vector<16x128xbf16>
    %cst_14 = arith.constant dense<0.000000e+00> : vector<8x128xf32>
    %17 = tpu.matmul %9, %16, %cst_14 {dimension_numbers = #tpu.dot_dimension_numbers<[1], [0], [0], [1], [0, 0, 1, 1], [], []>} : vector<8x16xbf16>, vector<16x128xbf16>, vector<8x128xf32> -> vector<8x128xf32>
    %cst_15 = arith.constant 0.000000e+00 : f32
    %18 = arith.cmpf ole, %0, %cst_15 : f32
    %cst_16 = arith.constant 1.000000e+00 : f32
    %cst_17 = arith.constant 0.000000e+00 : f32
    %19 = arith.select %18, %cst_16, %cst_17 : f32
    %20 = vector.broadcast %19 : f32 to vector<8x128xf32>
    %21 = arith.addf %11, %20 : vector<8x128xf32>
    %cst_18 = arith.constant 0.000000e+00 : f32
    %22 = arith.cmpf ole, %1, %cst_18 : f32
    %cst_19 = arith.constant 1.000000e+00 : f32
    %cst_20 = arith.constant 0.000000e+00 : f32
    %23 = arith.select %22, %cst_19, %cst_20 : f32
    %24 = vector.broadcast %23 : f32 to vector<8x128xf32>
    %25 = arith.addf %15, %24 : vector<8x128xf32>
    %cst_21 = arith.constant 0.000000e+00 : f32
    %26 = arith.cmpf olt, %2, %cst_21 : f32
    %cst_22 = arith.constant 1.000000e+00 : f32
    %cst_23 = arith.constant 0.000000e+00 : f32
    %27 = arith.select %26, %cst_22, %cst_23 : f32
    %28 = vector.broadcast %27 : f32 to vector<8x128xf32>
    %29 = arith.addf %13, %28 : vector<8x128xf32>
    %cst_24 = arith.constant 0.000000e+00 : f32
    %30 = arith.cmpf olt, %3, %cst_24 : f32
    %cst_25 = arith.constant 1.000000e+00 : f32
    %cst_26 = arith.constant 0.000000e+00 : f32
    %31 = arith.select %30, %cst_25, %cst_26 : f32
    %32 = vector.broadcast %31 : f32 to vector<8x128xf32>
    %33 = arith.addf %17, %32 : vector<8x128xf32>
    %cst_27 = arith.constant 0.000000e+00 : f32
    %34 = vector.broadcast %cst_27 : f32 to vector<8x128xf32>
    %35 = arith.cmpf oeq, %21, %34 : vector<8x128xf32>
    %cst_28 = arith.constant 0.000000e+00 : f32
    %36 = vector.broadcast %cst_28 : f32 to vector<8x128xf32>
    %37 = arith.cmpf oeq, %25, %36 : vector<8x128xf32>
    %38 = arith.andi %35, %37 : vector<8x128xi1>
    %cst_29 = arith.constant 0.000000e+00 : f32
    %39 = vector.broadcast %cst_29 : f32 to vector<8x128xf32>
    %40 = arith.cmpf ogt, %29, %39 : vector<8x128xf32>
    %cst_30 = arith.constant 0.000000e+00 : f32
    %41 = vector.broadcast %cst_30 : f32 to vector<8x128xf32>
    %42 = arith.cmpf ogt, %33, %41 : vector<8x128xf32>
    %43 = arith.ori %40, %42 : vector<8x128xi1>
    %cst_31 = arith.constant 0.000000e+00 : f32
    %44 = arith.subf %cst_31, %4 : f32
    %cst_32 = arith.constant 0.000000e+00 : f32
    %45 = vector.broadcast %5 : f32 to vector<8x128xf32>
    %46 = vector.broadcast %cst_32 : f32 to vector<8x128xf32>
    %47 = arith.select %43, %45, %46 : vector<8x128xi1>, vector<8x128xf32>
    %48 = vector.broadcast %44 : f32 to vector<8x128xf32>
    %49 = arith.select %38, %48, %47 : vector<8x128xi1>, vector<8x128xf32>
    %c0_33 = arith.constant 0 : index
    %c0_34 = arith.constant 0 : index
    %50 = vector.load %arg3[%c0_33, %c0_34] : memref<8x128xf32, #tpu.memory_space<vmem>>, vector<8x128xf32>
    %51 = arith.addf %50, %49 : vector<8x128xf32>
    %c0_35 = arith.constant 0 : index
    %c0_36 = arith.constant 0 : index
    %52 = vector.load %arg10[%c0_35, %c0_36] : memref<8x128xf32, #tpu.memory_space<vmem>>, vector<8x128xf32>
    tpu.vector_store %arg10[%c0_35, %c0_36], %51 {strides = array<i32>} : memref<8x128xf32, #tpu.memory_space<vmem>>, vector<8x128xf32>,
    return
  }
  func.func @transform_0(%arg0: i32, %arg1: i32) -> i32 {
    %c0_i32 = arith.constant 0 : i32
    %c0_i32_0 = arith.constant 0 : i32
    return %c0_i32 : i32
  }
  func.func @transform_1(%arg0: i32, %arg1: i32) -> (i32, i32) {
    %c0_i32 = arith.constant 0 : i32
    return %arg1, %arg0 : i32, i32
  }
  func.func @transform_2(%arg0: i32, %arg1: i32) -> (i32, i32) {
    %c0_i32 = arith.constant 0 : i32
    %c0_i32_0 = arith.constant 0 : i32
    return %c0_i32, %arg0 : i32, i32
  }
  func.func @transform_3(%arg0: i32, %arg1: i32) -> (i32, i32) {
    %c0_i32 = arith.constant 0 : i32
    %c0_i32_0 = arith.constant 0 : i32
    return %c0_i32, %arg0 : i32, i32
  }
  func.func @transform_4(%arg0: i32, %arg1: i32) -> (i32, i32) {
    %c0_i32 = arith.constant 0 : i32
    %c0_i32_0 = arith.constant 0 : i32
    return %c0_i32, %arg0 : i32, i32
  }
  func.func @transform_5(%arg0: i32, %arg1: i32) -> (i32, i32) {
    %c0_i32 = arith.constant 0 : i32
    %c0_i32_0 = arith.constant 0 : i32
    return %c0_i32, %arg0 : i32, i32
  }
  func.func @transform_6(%arg0: i32, %arg1: i32) -> (i32, i32) {
    %c0_i32 = arith.constant 0 : i32
    %c0_i32_0 = arith.constant 0 : i32
    return %arg1, %c0_i32 : i32, i32
  }
  func.func @transform_7(%arg0: i32, %arg1: i32) -> (i32, i32) {
    %c0_i32 = arith.constant 0 : i32
    %c0_i32_0 = arith.constant 0 : i32
    return %arg1, %c0_i32 : i32, i32
  }
  func.func @transform_8(%arg0: i32, %arg1: i32) -> (i32, i32) {
    %c0_i32 = arith.constant 0 : i32
    return %arg1, %arg0 : i32, i32
  }
}

</mosaic_0001>

<llo_original>
// kernel: causality_review.1
$region0: #{causality_review.1}
  #allocation0 [shape = 'u32[]', space=smem, size = 0x4, offset = 0x4, fixed_abs, tag = 'smem constant byte address 0x4 - core index']
  #allocation1 [shape = 'u32[144,128]{1,0:T(1,128)}', space=vmem, size = 0x12000, scoped, tag = 'internal scratch']
  %s0 = inlined_call_operand.vmem [shape: f32[6], index: 0, kind: input, shape index: {}]
  %s1 = inlined_call_operand.vmem [shape: f32[8,256], index: 1, kind: input, shape index: {}]
  %s2 = inlined_call_operand.vmem [shape: bf16[24,256], index: 2, kind: input, shape index: {}]
  %s3 = inlined_call_operand.vmem [shape: bf16[24,256], index: 3, kind: input, shape index: {}]
  %s4 = inlined_call_operand.vmem [shape: bf16[16,256], index: 4, kind: input, shape index: {}]
  %s5 = inlined_call_operand.vmem [shape: bf16[16,256], index: 5, kind: input, shape index: {}]
  %s6 = inlined_call_operand.vmem [shape: f32[8,24], index: 6, kind: input, shape index: {}]
  %s7 = inlined_call_operand.vmem [shape: f32[8,16], index: 7, kind: input, shape index: {}]
  %s8 = inlined_call_operand.vmem [shape: f32[8,256], index: 8, kind: output, shape index: {}]
  %s9 = sld [smem:[#allocation0]]
  $region233: #{causality_review.1} parent=0
    _
  %s11 = ssub.s32 1, %s9
  %s12 = scalar_select 0, %s11, %s9
  $region1: #{causality_review.1} parent=0
    #allocation2 [shape = 'u8[512]{0}', space=smem, size = 0x200, scoped, tag = 'input window, operand 0, single buffered']
    #allocation3 [shape = 's32[2]{0}', space=sflag, size = 0x8, scoped, tag = 'scoped memory for causality_review.1']
    #allocation4 [shape = 'u8[12288]{0}', space=vmem, size = 0x3000, scoped, tag = 'input window, operand 2']
    #allocation5 [shape = 'u8[12288]{0}', space=vmem, size = 0x3000, scoped, tag = 'input window, operand 3']
    #allocation6 [shape = 'u8[8192]{0}', space=vmem, size = 0x2000, scoped, tag = 'input window, operand 4']
    #allocation7 [shape = 'u8[8192]{0}', space=vmem, size = 0x2000, scoped, tag = 'input window, operand 5']
    %13 = vsyncpa [#allocation3], 0
    loop: start=0, step=1, limit=4
    $region2: #{causality_review.1} parent=1 // loop_pre_header
      _
    $region3: #{causality_review.1} parent=1 // loop_header
      %s15 = sphi 0, %s19
      %p16 = scmp.ge.s32.totalorder %s15, 4
      %s22 = sphi 0, %s34
      %s23 = sphi 0, %s30
      %s24 = sphi 0, %s22
      %s25 = sphi 0, %s23
      %s26 = sphi 0, %s24
      %s27 = sphi 0, %s25
      %s35 = sphi 0, %s35
      %s37 = sphi 0, %s35
      %s38 = sphi 0, %s37
      %s52 = sphi 0, %s38
      %s60 = sphi 0, %s62
      %s63 = sphi 0, %s60
      %s64 = sphi 0, %s63
      %s80 = sphi 0, %s64
      %s86 = sphi 0, %s88
      %s89 = sphi 0, %s86
      %s90 = sphi 0, %s89
      %s106 = sphi 0, %s90
      %s112 = sphi 0, %s114
      %s115 = sphi 0, %s112
      %s116 = sphi 0, %s115
      %s132 = sphi 0, %s116
      %s138 = sphi 0, %s140
      %s141 = sphi 0, %s138
      %s142 = sphi 0, %s141
      %s158 = sphi 0, %s142
      %s164 = sphi 0, %s166
      %s167 = sphi 0, %s164
      %s168 = sphi 0, %s167
      %s184 = sphi 0, %s168
      %s190 = sphi 0, %s192
      %s193 = sphi 0, %s190
      %s194 = sphi 0, %s193
      %s210 = sphi 0, %s194
      %s216 = sphi 0, %s218
      %s219 = sphi 0, %s216
      %s220 = sphi 0, %s219
      %s236 = sphi 0, %s220
      %s244 = sphi 0, %s246
      %s247 = sphi 0, %s244
      %s248 = sphi 0, %s247
      %s264 = sphi 0, %s248
    $region4: #{causality_review.1} parent=1 // loop_header_branch
      %18 = sbr.rel (%p16) target = $region8
    $region5: #{causality_review.1} parent=1 // loop_body
      %s20 = ssub.s32 %s15, 1
      %s21 = ssub.s32 %s15, 2
      %s28 = sadd.s32 1, %s23
      %p29 = scmp.ge.s32.totalorder %s28, 1
      %s30 = scalar_select %p29, 0, %s28
      %s31 = sadd.s32 1, %s22
      %s32 = scalar_select %p29, %s31, %s22
      %p33 = scmp.ge.s32.totalorder %s32, 2
      %s34 = scalar_select %p33, 0, %s32
      %s36 = sadd.s32 %s35, 1
      %p39 = scmp.eq.s32.totalorder %s15, 1
      %p40 = scmp.ne.s32.totalorder %s35, %s37
      %p41 = scmp.eq.s32.totalorder %s15, 0
      %p42 = por %p40, %p41
      %p43 = scmp.ne.s32.totalorder %s35, %s37
      %p44 = scmp.eq.s32.totalorder %s20, 1
      %p45 = por %p43, %p44
      %p46 = scmp.ne.s32.totalorder %s37, %s38
      %p47 = scmp.eq.s32.totalorder %s20, 0
      %p48 = por %p46, %p47
      %p49 = scmp.ne.s32.totalorder %s37, %s38
      %p50 = scmp.eq.s32.totalorder %s21, 1
      %p51 = por %p49, %p50
      %p53 = scmp.ne.s32.totalorder %s38, %s52
      %p54 = scmp.eq.s32.totalorder %s21, 0
      %p55 = por %p53, %p54
      %s56 = ssub.s32 %s23, %s30
      %s57 = ssub.s32 %s22, %s34
      %s58 = sor.u32 %s56, %s57
      %p59 = scmp.eq.s32.totalorder %s58, 0
      %s61 = sadd.s32 %s60, 1
      %s62 = scalar_select %p59, %s60, %s61
      %p65 = pneg %p59
      %p66 = scmp.eq.s32.totalorder %s15, 1
      %p67 = por %p65, %p66
      %p68 = scmp.ne.s32.totalorder %s60, %s63
      %p69 = scmp.eq.s32.totalorder %s15, 0
      %p70 = por %p68, %p69
      %p71 = scmp.ne.s32.totalorder %s60, %s63
      %p72 = scmp.eq.s32.totalorder %s20, 1
      %p73 = por %p71, %p72
      %p74 = scmp.ne.s32.totalorder %s63, %s64
      %p75 = scmp.eq.s32.totalorder %s20, 0
      %p76 = por %p74, %p75
      %p77 = scmp.ne.s32.totalorder %s63, %s64
      %p78 = scmp.eq.s32.totalorder %s21, 1
      %p79 = por %p77, %p78
      %p81 = scmp.ne.s32.totalorder %s64, %s80
      %p82 = scmp.eq.s32.totalorder %s21, 0
      %p83 = por %p81, %p82
      %s84 = ssub.s32 %s22, %s34
      %p85 = scmp.eq.s32.totalorder %s84, 0
      %s87 = sadd.s32 %s86, 1
      %s88 = scalar_select %p85, %s86, %s87
      %p91 = pneg %p85
      %p92 = scmp.eq.s32.totalorder %s15, 1
      %p93 = por %p91, %p92
      %p94 = scmp.ne.s32.totalorder %s86, %s89
      %p95 = scmp.eq.s32.totalorder %s15, 0
      %p96 = por %p94, %p95
      %p97 = scmp.ne.s32.totalorder %s86, %s89
      %p98 = scmp.eq.s32.totalorder %s20, 1
      %p99 = por %p97, %p98
      %p100 = scmp.ne.s32.totalorder %s89, %s90
      %p101 = scmp.eq.s32.totalorder %s20, 0
      %p102 = por %p100, %p101
      %p103 = scmp.ne.s32.totalorder %s89, %s90
      %p104 = scmp.eq.s32.totalorder %s21, 1
      %p105 = por %p103, %p104
      %p107 = scmp.ne.s32.totalorder %s90, %s106
      %p108 = scmp.eq.s32.totalorder %s21, 0
      %p109 = por %p107, %p108
      %s110 = ssub.s32 %s22, %s34
      %p111 = scmp.eq.s32.totalorder %s110, 0
      %s113 = sadd.s32 %s112, 1
      %s114 = scalar_select %p111, %s112, %s113
      %p117 = pneg %p111
      %p118 = scmp.eq.s32.totalorder %s15, 1
      %p119 = por %p117, %p118
      %p120 = scmp.ne.s32.totalorder %s112, %s115
      %p121 = scmp.eq.s32.totalorder %s15, 0
      %p122 = por %p120, %p121
      %p123 = scmp.ne.s32.totalorder %s112, %s115
      %p124 = scmp.eq.s32.totalorder %s20, 1
      %p125 = por %p123, %p124
      %p126 = scmp.ne.s32.totalorder %s115, %s116
      %p127 = scmp.eq.s32.totalorder %s20, 0
      %p128 = por %p126, %p127
      %p129 = scmp.ne.s32.totalorder %s115, %s116
      %p130 = scmp.eq.s32.totalorder %s21, 1
      %p131 = por %p129, %p130
      %p133 = scmp.ne.s32.totalorder %s116, %s132
      %p134 = scmp.eq.s32.totalorder %s21, 0
      %p135 = por %p133, %p134
      %s136 = ssub.s32 %s22, %s34
      %p137 = scmp.eq.s32.totalorder %s136, 0
      %s139 = sadd.s32 %s138, 1
      %s140 = scalar_select %p137, %s138, %s139
      %p143 = pneg %p137
      %p144 = scmp.eq.s32.totalorder %s15, 1
      %p145 = por %p143, %p144
      %p146 = scmp.ne.s32.totalorder %s138, %s141
      %p147 = scmp.eq.s32.totalorder %s15, 0
      %p148 = por %p146, %p147
      %p149 = scmp.ne.s32.totalorder %s138, %s141
      %p150 = scmp.eq.s32.totalorder %s20, 1
      %p151 = por %p149, %p150
      %p152 = scmp.ne.s32.totalorder %s141, %s142
      %p153 = scmp.eq.s32.totalorder %s20, 0
      %p154 = por %p152, %p153
      %p155 = scmp.ne.s32.totalorder %s141, %s142
      %p156 = scmp.eq.s32.totalorder %s21, 1
      %p157 = por %p155, %p156
      %p159 = scmp.ne.s32.totalorder %s142, %s158
      %p160 = scmp.eq.s32.totalorder %s21, 0
      %p161 = por %p159, %p160
      %s162 = ssub.s32 %s22, %s34
      %p163 = scmp.eq.s32.totalorder %s162, 0
      %s165 = sadd.s32 %s164, 1
      %s166 = scalar_select %p163, %s164, %s165
      %p169 = pneg %p163
      %p170 = scmp.eq.s32.totalorder %s15, 1
      %p171 = por %p169, %p170
      %p172 = scmp.ne.s32.totalorder %s164, %s167
      %p173 = scmp.eq.s32.totalorder %s15, 0
      %p174 = por %p172, %p173
      %p175 = scmp.ne.s32.totalorder %s164, %s167
      %p176 = scmp.eq.s32.totalorder %s20, 1
      %p177 = por %p175, %p176
      %p178 = scmp.ne.s32.totalorder %s167, %s168
      %p179 = scmp.eq.s32.totalorder %s20, 0
      %p180 = por %p178, %p179
      %p181 = scmp.ne.s32.totalorder %s167, %s168
      %p182 = scmp.eq.s32.totalorder %s21, 1
      %p183 = por %p181, %p182
      %p185 = scmp.ne.s32.totalorder %s168, %s184
      %p186 = scmp.eq.s32.totalorder %s21, 0
      %p187 = por %p185, %p186
      %s188 = ssub.s32 %s23, %s30
      %p189 = scmp.eq.s32.totalorder %s188, 0
      %s191 = sadd.s32 %s190, 1
      %s192 = scalar_select %p189, %s190, %s191
      %p195 = pneg %p189
      %p196 = scmp.eq.s32.totalorder %s15, 1
      %p197 = por %p195, %p196
      %p198 = scmp.ne.s32.totalorder %s190, %s193
      %p199 = scmp.eq.s32.totalorder %s15, 0
      %p200 = por %p198, %p199
      %p201 = scmp.ne.s32.totalorder %s190, %s193
      %p202 = scmp.eq.s32.totalorder %s20, 1
      %p203 = por %p201, %p202
      %p204 = scmp.ne.s32.totalorder %s193, %s194
      %p205 = scmp.eq.s32.totalorder %s20, 0
      %p206 = por %p204, %p205
      %p207 = scmp.ne.s32.totalorder %s193, %s194
      %p208 = scmp.eq.s32.totalorder %s21, 1
      %p209 = por %p207, %p208
      %p211 = scmp.ne.s32.totalorder %s194, %s210
      %p212 = scmp.eq.s32.totalorder %s21, 0
      %p213 = por %p211, %p212
      %s214 = ssub.s32 %s23, %s30
      %p215 = scmp.eq.s32.totalorder %s214, 0
      %s217 = sadd.s32 %s216, 1
      %s218 = scalar_select %p215, %s216, %s217
      %p221 = pneg %p215
      %p222 = scmp.eq.s32.totalorder %s15, 1
      %p223 = por %p221, %p222
      %p224 = scmp.ne.s32.totalorder %s216, %s219
      %p225 = scmp.eq.s32.totalorder %s15, 0
      %p226 = por %p224, %p225
      %p227 = scmp.ne.s32.totalorder %s216, %s219
      %p228 = scmp.eq.s32.totalorder %s20, 1
      %p229 = por %p227, %p228
      %p230 = scmp.ne.s32.totalorder %s219, %s220
      %p231 = scmp.eq.s32.totalorder %s20, 0
      %p232 = por %p230, %p231
      %p233 = scmp.ne.s32.totalorder %s219, %s220
      %p234 = scmp.eq.s32.totalorder %s21, 1
      %p235 = por %p233, %p234
      %p237 = scmp.ne.s32.totalorder %s220, %s236
      %p238 = scmp.eq.s32.totalorder %s21, 0
      %p239 = por %p237, %p238
      %s240 = ssub.s32 %s23, %s30
      %s241 = ssub.s32 %s22, %s34
      %s242 = sor.u32 %s240, %s241
      %p243 = scmp.eq.s32.totalorder %s242, 0
      %s245 = sadd.s32 %s244, 1
      %s246 = scalar_select %p243, %s244, %s245
      %p249 = pneg %p243
      %p250 = scmp.eq.s32.totalorder %s15, 1
      %p251 = por %p249, %p250
      %p252 = scmp.ne.s32.totalorder %s244, %s247
      %p253 = scmp.eq.s32.totalorder %s15, 0
      %p254 = por %p252, %p253
      %p255 = scmp.ne.s32.totalorder %s244, %s247
      %p256 = scmp.eq.s32.totalorder %s20, 1
      %p257 = por %p255, %p256
      %p258 = scmp.ne.s32.totalorder %s247, %s248
      %p259 = scmp.eq.s32.totalorder %s20, 0
      %p260 = por %p258, %p259
      %p261 = scmp.ne.s32.totalorder %s247, %s248
      %p262 = scmp.eq.s32.totalorder %s21, 1
      %p263 = por %p261, %p262
      %p265 = scmp.ne.s32.totalorder %s248, %s264
      %p266 = scmp.eq.s32.totalorder %s21, 0
      %p267 = por %p265, %p266
      %p268 = scmp.le.s32.totalorder 1, %s15
      %p269 = scmp.lt.s32.totalorder %s15, 3
      %p270 = pnand %p268, %p269
      %p271 = pneg %p270
      // Predicated region
      $region9: #{causality_review.1} parent=5 // pred_check
        _
      $region10: #{causality_review.1} parent=5 // pred_check_branch
        %273 = sbr.rel (%p270) target = $region12
      $region11: #{causality_review.1} parent=5 // pred_region
        %s274 = ssub.s32 %s15, 1
        // Predicated region
        $region13: #{causality_review.1} parent=11 // pred_check
          %p275 = pneg %p48
        $region14: #{causality_review.1} parent=11 // pred_check_branch
          %277 = sbr.rel (%p275) target = $region16
        $region15: #{causality_review.1} parent=11 // pred_region
          %s279 = ssub.s32 16, 16
          %280 = vsyncadd [#allocation3], %s279
          %s282 = sshll.u32 %s0, 4
          %s283 = int_to_ptr.vmem [resolvable:$true] %s282
          %285 = dma.vmem_to_smem %s283, 16, [#allocation2], [#allocation3]
        $region16: #{causality_review.1} parent=11 // pred_fallthru
          _
        // Predicated region
        $region17: #{causality_review.1} parent=11 // pred_check
          %p286 = pneg %p206
        $region18: #{causality_review.1} parent=11 // pred_check_branch
          %288 = sbr.rel (%p286) target = $region20
        $region19: #{causality_review.1} parent=11 // pred_region
          %p289 = scmp.lt.s32.totalorder %s25, 0
          %s290 = scalar_select %p289, %s25, 0
          %s291 = smul.addr %s290, 8
          %s292 = scalar_lea.vmem %s6, %s291
        $region20: #{causality_review.1} parent=11 // pred_fallthru
          _
        // Predicated region
        $region21: #{causality_review.1} parent=11 // pred_check
          %p293 = pneg %p232
        $region22: #{causality_review.1} parent=11 // pred_check_branch
          %295 = sbr.rel (%p293) target = $region24
        $region23: #{causality_review.1} parent=11 // pred_region
          %p296 = scmp.lt.s32.totalorder %s25, 0
          %s297 = scalar_select %p296, %s25, 0
          %s298 = smul.addr %s297, 8
          %s299 = scalar_lea.vmem %s7, %s298
        $region24: #{causality_review.1} parent=11 // pred_fallthru
          _
      $region12: #{causality_review.1} parent=5 // pred_fallthru
        _
      %p300 = scmp.lt.s32.totalorder %s15, 2
      // Predicated region
      $region25: #{causality_review.1} parent=5 // pred_check
        %p301 = pneg %p300
      $region26: #{causality_review.1} parent=5 // pred_check_branch
        %303 = sbr.rel (%p301) target = $region28
      $region27: #{causality_review.1} parent=5 // pred_region
        // Predicated region
        $region29: #{causality_review.1} parent=27 // pred_check
          %p304 = pneg %p70
        $region30: #{causality_review.1} parent=27 // pred_check_branch
          %306 = sbr.rel (%p304) target = $region32
        $region31: #{causality_review.1} parent=27 // pred_region
          %p307 = scmp.lt.s32.totalorder %s23, 0
          %s308 = scalar_select %p307, %s23, 0
          %p309 = scmp.lt.s32.totalorder %s22, 1
          %s310 = scalar_select %p309, %s22, 1
          %s311 = smul.addr %s308, 2
          %s312 = sadd.s32 %s310, %s311
          %s313 = smul.addr %s312, 8
          %s314 = scalar_lea.vmem %s1, %s313
        $region32: #{causality_review.1} parent=27 // pred_fallthru
          _
        // Predicated region
        $region33: #{causality_review.1} parent=27 // pred_check
          %p315 = pneg %p96
        $region34: #{causality_review.1} parent=27 // pred_check_branch
          %317 = sbr.rel (%p315) target = $region36
        $region35: #{causality_review.1} parent=27 // pred_region
          %s318 = sand.u32 %s86, 1
          %s319 = sand.u32 %s86, 1
          %s320 = smul.addr %s319, 12
          %s321 = scalar_lea.vmem [#allocation4], %s320
          %s322 = smul.addr %s22, 4
          %s323 = scalar_lea.vmem %s2, %s322
          // Predicated region
          $region37: #{causality_review.1} parent=35 // pred_check
            _
          $region38: #{causality_review.1} parent=35 // pred_check_branch
            %325 = sbr.rel (0) target = $region40
          $region39: #{causality_review.1} parent=35 // pred_region
            // Predicated region
            $region41: #{causality_review.1} parent=39 // pred_check
              _
            $region42: #{causality_review.1} parent=39 // pred_check_branch
              %327 = sbr.rel target = $region44
            $region43: #{causality_review.1} parent=39 // pred_region
              // Predicated region
              $region56: #{causality_review.1} parent=43 // pred_check
                _
              $region57: #{causality_review.1} parent=43 // pred_check_branch
                %346 = sbr.rel (0) target = $region59
              $region58: #{causality_review.1} parent=43 // pred_region
                loop: start=0, step=1, limit=1
                $region60: #{causality_review.1} parent=58 // loop_pre_header
                  _
                $region61: #{causality_review.1} parent=58 // loop_header
                  %s348 = sphi 0, %s352
                  %p349 = scmp.ge.s32.totalorder %s348, 1
                  %s353 = sphi %s323, %s323
                  %s354 = sphi %s321, %s321
                $region62: #{causality_review.1} parent=58 // loop_header_branch
                  %351 = sbr.rel (%p349) target = $region66
                $region63: #{causality_review.1} parent=58 // loop_body
                  _
                $region64: #{causality_review.1} parent=58 // loop_footer
                  %s352 = sadd.s32 1, %s348
                $region65: #{causality_review.1} parent=58 // loop_footer_branch
                  %347 = sbr.rel target = $region61
                $region66: #{causality_review.1} parent=58 // loop_exit
                  _
                loop: start=0, step=1, limit=1
                $region67: #{causality_review.1} parent=58 // loop_pre_header
                  _
                $region68: #{causality_review.1} parent=58 // loop_header
                  %s357 = sphi 0, %s361
                  %p358 = scmp.ge.s32.totalorder %s357, 1
                  %s362 = sphi %s323, %s323
                  %s363 = sphi %s321, %s321
                $region69: #{causality_review.1} parent=58 // loop_header_branch
                  %360 = sbr.rel (%p358) target = $region73
                $region70: #{causality_review.1} parent=58 // loop_body
                  %v364 = vld [vmem:[%s362] sm:$0xf]
                  %365 = vst [vmem:[%s363] sm:$0xf] %v364
                  %v366 = vld [vmem:[%s362 + $0x8] sm:$0xf]
                  %367 = vst [vmem:[%s363 + $0x4] sm:$0xf] %v366
                  %v368 = vld [vmem:[%s362 + $0x10] sm:$0xf]
                  %369 = vst [vmem:[%s363 + $0x8] sm:$0xf] %v368
                $region71: #{causality_review.1} parent=58 // loop_footer
                  %s361 = sadd.s32 1, %s357
                $region72: #{causality_review.1} parent=58 // loop_footer_branch
                  %356 = sbr.rel target = $region68
                $region73: #{causality_review.1} parent=58 // loop_exit
                  _
              $region59: #{causality_review.1} parent=43 // pred_fallthru
                _
            $region44: #{causality_review.1} parent=39 // pred_fallthru
              _
            // Predicated region
            $region45: #{causality_review.1} parent=39 // pred_check
              _
            $region46: #{causality_review.1} parent=39 // pred_check_branch
              %329 = sbr.rel (0) target = $region48
            $region47: #{causality_review.1} parent=39 // pred_region
              loop: start=0, step=1, limit=1
              $region49: #{causality_review.1} parent=47 // loop_pre_header
                _
              $region50: #{causality_review.1} parent=47 // loop_header
                %s332 = sphi 0, %s336
                %p333 = scmp.ge.s32.totalorder %s332, 1
                %s337 = sphi %s323, %s323
                %s338 = sphi %s321, %s321
              $region51: #{causality_review.1} parent=47 // loop_header_branch
                %335 = sbr.rel (%p333) target = $region55
              $region52: #{causality_review.1} parent=47 // loop_body
                %v339 = vld [vmem:[%s337] sm:$0xf]
                %340 = vst [vmem:[%s338] sm:$0xf] %v339
                %v341 = vld [vmem:[%s337 + $0x8] sm:$0xf]
                %342 = vst [vmem:[%s338 + $0x4] sm:$0xf] %v341
                %v343 = vld [vmem:[%s337 + $0x10] sm:$0xf]
                %344 = vst [vmem:[%s338 + $0x8] sm:$0xf] %v343
              $region53: #{causality_review.1} parent=47 // loop_footer
                %s336 = sadd.s32 1, %s332
              $region54: #{causality_review.1} parent=47 // loop_footer_branch
                %331 = sbr.rel target = $region50
              $region55: #{causality_review.1} parent=47 // loop_exit
                _
            $region48: #{causality_review.1} parent=39 // pred_fallthru
              _
          $region40: #{causality_review.1} parent=35 // pred_fallthru
            _
          %370 = vnop
        $region36: #{causality_review.1} parent=27 // pred_fallthru
          _
        // Predicated region
        $region74: #{causality_review.1} parent=27 // pred_check
          %p371 = pneg %p122
        $region75: #{causality_review.1} parent=27 // pred_check_branch
          %373 = sbr.rel (%p371) target = $region77
        $region76: #{causality_review.1} parent=27 // pred_region
          %s374 = sand.u32 %s112, 1
          %s375 = sand.u32 %s112, 1
          %s376 = smul.addr %s375, 12
          %s377 = scalar_lea.vmem [#allocation5], %s376
          %s378 = smul.addr %s22, 4
          %s379 = scalar_lea.vmem %s3, %s378
          // Predicated region
          $region78: #{causality_review.1} parent=76 // pred_check
            _
          $region79: #{causality_review.1} parent=76 // pred_check_branch
            %381 = sbr.rel (0) target = $region81
          $region80: #{causality_review.1} parent=76 // pred_region
            // Predicated region
            $region82: #{causality_review.1} parent=80 // pred_check
              _
            $region83: #{causality_review.1} parent=80 // pred_check_branch
              %383 = sbr.rel target = $region85
            $region84: #{causality_review.1} parent=80 // pred_region
              // Predicated region
              $region97: #{causality_review.1} parent=84 // pred_check
                _
              $region98: #{causality_review.1} parent=84 // pred_check_branch
                %402 = sbr.rel (0) target = $region100
              $region99: #{causality_review.1} parent=84 // pred_region
                loop: start=0, step=1, limit=1
                $region101: #{causality_review.1} parent=99 // loop_pre_header
                  _
                $region102: #{causality_review.1} parent=99 // loop_header
                  %s404 = sphi 0, %s408
                  %p405 = scmp.ge.s32.totalorder %s404, 1
                  %s409 = sphi %s379, %s379
                  %s410 = sphi %s377, %s377
                $region103: #{causality_review.1} parent=99 // loop_header_branch
                  %407 = sbr.rel (%p405) target = $region107
                $region104: #{causality_review.1} parent=99 // loop_body
                  _
                $region105: #{causality_review.1} parent=99 // loop_footer
                  %s408 = sadd.s32 1, %s404
                $region106: #{causality_review.1} parent=99 // loop_footer_branch
                  %403 = sbr.rel target = $region102
                $region107: #{causality_review.1} parent=99 // loop_exit
                  _
                loop: start=0, step=1, limit=1
                $region108: #{causality_review.1} parent=99 // loop_pre_header
                  _
                $region109: #{causality_review.1} parent=99 // loop_header
                  %s413 = sphi 0, %s417
                  %p414 = scmp.ge.s32.totalorder %s413, 1
                  %s418 = sphi %s379, %s379
                  %s419 = sphi %s377, %s377
                $region110: #{causality_review.1} parent=99 // loop_header_branch
                  %416 = sbr.rel (%p414) target = $region114
                $region111: #{causality_review.1} parent=99 // loop_body
                  %v420 = vld [vmem:[%s418] sm:$0xf]
                  %421 = vst [vmem:[%s419] sm:$0xf] %v420
                  %v422 = vld [vmem:[%s418 + $0x8] sm:$0xf]
                  %423 = vst [vmem:[%s419 + $0x4] sm:$0xf] %v422
                  %v424 = vld [vmem:[%s418 + $0x10] sm:$0xf]
                  %425 = vst [vmem:[%s419 + $0x8] sm:$0xf] %v424
                $region112: #{causality_review.1} parent=99 // loop_footer
                  %s417 = sadd.s32 1, %s413
                $region113: #{causality_review.1} parent=99 // loop_footer_branch
                  %412 = sbr.rel target = $region109
                $region114: #{causality_review.1} parent=99 // loop_exit
                  _
              $region100: #{causality_review.1} parent=84 // pred_fallthru
                _
            $region85: #{causality_review.1} parent=80 // pred_fallthru
              _
            // Predicated region
            $region86: #{causality_review.1} parent=80 // pred_check
              _
            $region87: #{causality_review.1} parent=80 // pred_check_branch
              %385 = sbr.rel (0) target = $region89
            $region88: #{causality_review.1} parent=80 // pred_region
              loop: start=0, step=1, limit=1
              $region90: #{causality_review.1} parent=88 // loop_pre_header
                _
              $region91: #{causality_review.1} parent=88 // loop_header
                %s388 = sphi 0, %s392
                %p389 = scmp.ge.s32.totalorder %s388, 1
                %s393 = sphi %s379, %s379
                %s394 = sphi %s377, %s377
              $region92: #{causality_review.1} parent=88 // loop_header_branch
                %391 = sbr.rel (%p389) target = $region96
              $region93: #{causality_review.1} parent=88 // loop_body
                %v395 = vld [vmem:[%s393] sm:$0xf]
                %396 = vst [vmem:[%s394] sm:$0xf] %v395
                %v397 = vld [vmem:[%s393 + $0x8] sm:$0xf]
                %398 = vst [vmem:[%s394 + $0x4] sm:$0xf] %v397
                %v399 = vld [vmem:[%s393 + $0x10] sm:$0xf]
                %400 = vst [vmem:[%s394 + $0x8] sm:$0xf] %v399
              $region94: #{causality_review.1} parent=88 // loop_footer
                %s392 = sadd.s32 1, %s388
              $region95: #{causality_review.1} parent=88 // loop_footer_branch
                %387 = sbr.rel target = $region91
              $region96: #{causality_review.1} parent=88 // loop_exit
                _
            $region89: #{causality_review.1} parent=80 // pred_fallthru
              _
          $region81: #{causality_review.1} parent=76 // pred_fallthru
            _
          %426 = vnop
        $region77: #{causality_review.1} parent=27 // pred_fallthru
          _
        // Predicated region
        $region115: #{causality_review.1} parent=27 // pred_check
          %p427 = pneg %p148
        $region116: #{causality_review.1} parent=27 // pred_check_branch
          %429 = sbr.rel (%p427) target = $region118
        $region117: #{causality_review.1} parent=27 // pred_region
          %s430 = sand.u32 %s138, 1
          %s431 = sand.u32 %s138, 1
          %s432 = smul.addr %s431, 8
          %s433 = scalar_lea.vmem [#allocation6], %s432
          %s434 = smul.addr %s22, 4
          %s435 = scalar_lea.vmem %s4, %s434
          // Predicated region
          $region119: #{causality_review.1} parent=117 // pred_check
            _
          $region120: #{causality_review.1} parent=117 // pred_check_branch
            %437 = sbr.rel (0) target = $region122
          $region121: #{causality_review.1} parent=117 // pred_region
            // Predicated region
            $region123: #{causality_review.1} parent=121 // pred_check
              _
            $region124: #{causality_review.1} parent=121 // pred_check_branch
              %439 = sbr.rel target = $region126
            $region125: #{causality_review.1} parent=121 // pred_region
              // Predicated region
              $region138: #{causality_review.1} parent=125 // pred_check
                _
              $region139: #{causality_review.1} parent=125 // pred_check_branch
                %456 = sbr.rel (0) target = $region141
              $region140: #{causality_review.1} parent=125 // pred_region
                loop: start=0, step=1, limit=1
                $region142: #{causality_review.1} parent=140 // loop_pre_header
                  _
                $region143: #{causality_review.1} parent=140 // loop_header
                  %s458 = sphi 0, %s462
                  %p459 = scmp.ge.s32.totalorder %s458, 1
                  %s463 = sphi %s435, %s435
                  %s464 = sphi %s433, %s433
                $region144: #{causality_review.1} parent=140 // loop_header_branch
                  %461 = sbr.rel (%p459) target = $region148
                $region145: #{causality_review.1} parent=140 // loop_body
                  _
                $region146: #{causality_review.1} parent=140 // loop_footer
                  %s462 = sadd.s32 1, %s458
                $region147: #{causality_review.1} parent=140 // loop_footer_branch
                  %457 = sbr.rel target = $region143
                $region148: #{causality_review.1} parent=140 // loop_exit
                  _
                loop: start=0, step=1, limit=1
                $region149: #{causality_review.1} parent=140 // loop_pre_header
                  _
                $region150: #{causality_review.1} parent=140 // loop_header
                  %s467 = sphi 0, %s471
                  %p468 = scmp.ge.s32.totalorder %s467, 1
                  %s472 = sphi %s435, %s435
                  %s473 = sphi %s433, %s433
                $region151: #{causality_review.1} parent=140 // loop_header_branch
                  %470 = sbr.rel (%p468) target = $region155
                $region152: #{causality_review.1} parent=140 // loop_body
                  %v474 = vld [vmem:[%s472] sm:$0xf]
                  %475 = vst [vmem:[%s473] sm:$0xf] %v474
                  %v476 = vld [vmem:[%s472 + $0x8] sm:$0xf]
                  %477 = vst [vmem:[%s473 + $0x4] sm:$0xf] %v476
                $region153: #{causality_review.1} parent=140 // loop_footer
                  %s471 = sadd.s32 1, %s467
                $region154: #{causality_review.1} parent=140 // loop_footer_branch
                  %466 = sbr.rel target = $region150
                $region155: #{causality_review.1} parent=140 // loop_exit
                  _
              $region141: #{causality_review.1} parent=125 // pred_fallthru
                _
            $region126: #{causality_review.1} parent=121 // pred_fallthru
              _
            // Predicated region
            $region127: #{causality_review.1} parent=121 // pred_check
              _
            $region128: #{causality_review.1} parent=121 // pred_check_branch
              %441 = sbr.rel (0) target = $region130
            $region129: #{causality_review.1} parent=121 // pred_region
              loop: start=0, step=1, limit=1
              $region131: #{causality_review.1} parent=129 // loop_pre_header
                _
              $region132: #{causality_review.1} parent=129 // loop_header
                %s444 = sphi 0, %s448
                %p445 = scmp.ge.s32.totalorder %s444, 1
                %s449 = sphi %s435, %s435
                %s450 = sphi %s433, %s433
              $region133: #{causality_review.1} parent=129 // loop_header_branch
                %447 = sbr.rel (%p445) target = $region137
              $region134: #{causality_review.1} parent=129 // loop_body
                %v451 = vld [vmem:[%s449] sm:$0xf]
                %452 = vst [vmem:[%s450] sm:$0xf] %v451
                %v453 = vld [vmem:[%s449 + $0x8] sm:$0xf]
                %454 = vst [vmem:[%s450 + $0x4] sm:$0xf] %v453
              $region135: #{causality_review.1} parent=129 // loop_footer
                %s448 = sadd.s32 1, %s444
              $region136: #{causality_review.1} parent=129 // loop_footer_branch
                %443 = sbr.rel target = $region132
              $region137: #{causality_review.1} parent=129 // loop_exit
                _
            $region130: #{causality_review.1} parent=121 // pred_fallthru
              _
          $region122: #{causality_review.1} parent=117 // pred_fallthru
            _
          %478 = vnop
        $region118: #{causality_review.1} parent=27 // pred_fallthru
          _
        // Predicated region
        $region156: #{causality_review.1} parent=27 // pred_check
          %p479 = pneg %p174
        $region157: #{causality_review.1} parent=27 // pred_check_branch
          %481 = sbr.rel (%p479) target = $region159
        $region158: #{causality_review.1} parent=27 // pred_region
          %s482 = sand.u32 %s164, 1
          %s483 = sand.u32 %s164, 1
          %s484 = smul.addr %s483, 8
          %s485 = scalar_lea.vmem [#allocation7], %s484
          %s486 = smul.addr %s22, 4
          %s487 = scalar_lea.vmem %s5, %s486
          // Predicated region
          $region160: #{causality_review.1} parent=158 // pred_check
            _
          $region161: #{causality_review.1} parent=158 // pred_check_branch
            %489 = sbr.rel (0) target = $region163
          $region162: #{causality_review.1} parent=158 // pred_region
            // Predicated region
            $region164: #{causality_review.1} parent=162 // pred_check
              _
            $region165: #{causality_review.1} parent=162 // pred_check_branch
              %491 = sbr.rel target = $region167
            $region166: #{causality_review.1} parent=162 // pred_region
              // Predicated region
              $region179: #{causality_review.1} parent=166 // pred_check
                _
              $region180: #{causality_review.1} parent=166 // pred_check_branch
                %508 = sbr.rel (0) target = $region182
              $region181: #{causality_review.1} parent=166 // pred_region
                loop: start=0, step=1, limit=1
                $region183: #{causality_review.1} parent=181 // loop_pre_header
                  _
                $region184: #{causality_review.1} parent=181 // loop_header
                  %s510 = sphi 0, %s514
                  %p511 = scmp.ge.s32.totalorder %s510, 1
                  %s515 = sphi %s487, %s487
                  %s516 = sphi %s485, %s485
                $region185: #{causality_review.1} parent=181 // loop_header_branch
                  %513 = sbr.rel (%p511) target = $region189
                $region186: #{causality_review.1} parent=181 // loop_body
                  _
                $region187: #{causality_review.1} parent=181 // loop_footer
                  %s514 = sadd.s32 1, %s510
                $region188: #{causality_review.1} parent=181 // loop_footer_branch
                  %509 = sbr.rel target = $region184
                $region189: #{causality_review.1} parent=181 // loop_exit
                  _
                loop: start=0, step=1, limit=1
                $region190: #{causality_review.1} parent=181 // loop_pre_header
                  _
                $region191: #{causality_review.1} parent=181 // loop_header
                  %s519 = sphi 0, %s523
                  %p520 = scmp.ge.s32.totalorder %s519, 1
                  %s524 = sphi %s487, %s487
                  %s525 = sphi %s485, %s485
                $region192: #{causality_review.1} parent=181 // loop_header_branch
                  %522 = sbr.rel (%p520) target = $region196
                $region193: #{causality_review.1} parent=181 // loop_body
                  %v526 = vld [vmem:[%s524] sm:$0xf]
                  %527 = vst [vmem:[%s525] sm:$0xf] %v526
                  %v528 = vld [vmem:[%s524 + $0x8] sm:$0xf]
                  %529 = vst [vmem:[%s525 + $0x4] sm:$0xf] %v528
                $region194: #{causality_review.1} parent=181 // loop_footer
                  %s523 = sadd.s32 1, %s519
                $region195: #{causality_review.1} parent=181 // loop_footer_branch
                  %518 = sbr.rel target = $region191
                $region196: #{causality_review.1} parent=181 // loop_exit
                  _
              $region182: #{causality_review.1} parent=166 // pred_fallthru
                _
            $region167: #{causality_review.1} parent=162 // pred_fallthru
              _
            // Predicated region
            $region168: #{causality_review.1} parent=162 // pred_check
              _
            $region169: #{causality_review.1} parent=162 // pred_check_branch
              %493 = sbr.rel (0) target = $region171
            $region170: #{causality_review.1} parent=162 // pred_region
              loop: start=0, step=1, limit=1
              $region172: #{causality_review.1} parent=170 // loop_pre_header
                _
              $region173: #{causality_review.1} parent=170 // loop_header
                %s496 = sphi 0, %s500
                %p497 = scmp.ge.s32.totalorder %s496, 1
                %s501 = sphi %s487, %s487
                %s502 = sphi %s485, %s485
              $region174: #{causality_review.1} parent=170 // loop_header_branch
                %499 = sbr.rel (%p497) target = $region178
              $region175: #{causality_review.1} parent=170 // loop_body
                %v503 = vld [vmem:[%s501] sm:$0xf]
                %504 = vst [vmem:[%s502] sm:$0xf] %v503
                %v505 = vld [vmem:[%s501 + $0x8] sm:$0xf]
                %506 = vst [vmem:[%s502 + $0x4] sm:$0xf] %v505
              $region176: #{causality_review.1} parent=170 // loop_footer
                %s500 = sadd.s32 1, %s496
              $region177: #{causality_review.1} parent=170 // loop_footer_branch
                %495 = sbr.rel target = $region173
              $region178: #{causality_review.1} parent=170 // loop_exit
                _
            $region171: #{causality_review.1} parent=162 // pred_fallthru
              _
          $region163: #{causality_review.1} parent=158 // pred_fallthru
            _
          %530 = vnop
        $region159: #{causality_review.1} parent=27 // pred_fallthru
          _
      $region28: #{causality_review.1} parent=5 // pred_fallthru
        _
      %p531 = scmp.le.s32.totalorder 1, %s15
      %p532 = scmp.lt.s32.totalorder %s15, 3
      %p533 = pnand %p531, %p532
      %p534 = pneg %p533
      // Predicated region
      $region197: #{causality_review.1} parent=5 // pred_check
        _
      $region198: #{causality_review.1} parent=5 // pred_check_branch
        %536 = sbr.rel (%p533) target = $region200
      $region199: #{causality_review.1} parent=5 // pred_region
        %s537 = ssub.s32 %s15, 1
        // Predicated region
        $region201: #{causality_review.1} parent=199 // pred_check
          %p538 = pneg %p48
        $region202: #{causality_review.1} parent=199 // pred_check_branch
          %540 = sbr.rel (%p538) target = $region204
        $region203: #{causality_review.1} parent=199 // pred_region
          %541 = dma.done [#allocation3], 16
        $region204: #{causality_review.1} parent=199 // pred_fallthru
          _
        %s542 = sand.u32 %s89, 1
        %s543 = sand.u32 %s89, 1
        %s544 = smul.addr %s543, 12
        %s545 = scalar_lea.vmem [#allocation4], %s544
        // Predicated region
        $region205: #{causality_review.1} parent=199 // pred_check
          %p546 = pneg %p102
        $region206: #{causality_review.1} parent=199 // pred_check_branch
          %548 = sbr.rel (%p546) target = $region208
        $region207: #{causality_review.1} parent=199 // pred_region
          _
        $region208: #{causality_review.1} parent=199 // pred_fallthru
          _
        %s549 = sand.u32 %s115, 1
        %s550 = sand.u32 %s115, 1
        %s551 = smul.addr %s550, 12
        %s552 = scalar_lea.vmem [#allocation5], %s551
        // Predicated region
        $region209: #{causality_review.1} parent=199 // pred_check
          %p553 = pneg %p128
        $region210: #{causality_review.1} parent=199 // pred_check_branch
          %555 = sbr.rel (%p553) target = $region212
        $region211: #{causality_review.1} parent=199 // pred_region
          _
        $region212: #{causality_review.1} parent=199 // pred_fallthru
          _
        %s556 = sand.u32 %s141, 1
        %s557 = sand.u32 %s141, 1
        %s558 = smul.addr %s557, 8
        %s559 = scalar_lea.vmem [#allocation6], %s558
        // Predicated region
        $region213: #{causality_review.1} parent=199 // pred_check
          %p560 = pneg %p154
        $region214: #{causality_review.1} parent=199 // pred_check_branch
          %562 = sbr.rel (%p560) target = $region216
        $region215: #{causality_review.1} parent=199 // pred_region
          _
        $region216: #{causality_review.1} parent=199 // pred_fallthru
          _
        %s563 = sand.u32 %s167, 1
        %s564 = sand.u32 %s167, 1
        %s565 = smul.addr %s564, 8
        %s566 = scalar_lea.vmem [#allocation7], %s565
        // Predicated region
        $region217: #{causality_review.1} parent=199 // pred_check
          %p567 = pneg %p180
        $region218: #{causality_review.1} parent=199 // pred_check_branch
          %569 = sbr.rel (%p567) target = $region220
        $region219: #{causality_review.1} parent=199 // pred_region
          _
        $region220: #{causality_review.1} parent=199 // pred_fallthru
          _
        %570 = sfence
        %p571 = pneg %p48
        %p572 = pneg %p45
        %p573 = scmp.lt.s32.totalorder %s25, 0
        %s574 = scalar_select %p573, %s25, 0
        %p575 = scmp.lt.s32.totalorder %s24, 1
        %s576 = scalar_select %p575, %s24, 1
        %s577 = smul.addr %s574, 2
        %s578 = sadd.s32 %s576, %s577
        %s579 = smul.addr %s578, 8
        %s580 = scalar_lea.vmem %s1, %s579
        %p581 = pneg %p76
        %p582 = pneg %p73
        %s583 = sand.u32 %s89, 1
        %s584 = sand.u32 %s89, 1
        %s585 = smul.addr %s584, 12
        %s586 = scalar_lea.vmem [#allocation4], %s585
        %p587 = pneg %p102
        %p588 = pneg %p99
        %s589 = sand.u32 %s115, 1
        %s590 = sand.u32 %s115, 1
        %s591 = smul.addr %s590, 12
        %s592 = scalar_lea.vmem [#allocation5], %s591
        %p593 = pneg %p128
        %p594 = pneg %p125
        %s595 = sand.u32 %s141, 1
        %s596 = sand.u32 %s141, 1
        %s597 = smul.addr %s596, 8
        %s598 = scalar_lea.vmem [#allocation6], %s597
        %p599 = pneg %p154
        %p600 = pneg %p151
        %s601 = sand.u32 %s167, 1
        %s602 = sand.u32 %s167, 1
        %s603 = smul.addr %s602, 8
        %s604 = scalar_lea.vmem [#allocation7], %s603
        %p605 = pneg %p180
        %p606 = pneg %p177
        %p607 = scmp.lt.s32.totalorder %s25, 0
        %s608 = scalar_select %p607, %s25, 0
        %s609 = smul.addr %s608, 8
        %s610 = scalar_lea.vmem %s6, %s609
        %p611 = pneg %p206
        %p612 = pneg %p203
        %p613 = scmp.lt.s32.totalorder %s25, 0
        %s614 = scalar_select %p613, %s25, 0
        %s615 = smul.addr %s614, 8
        %s616 = scalar_lea.vmem %s7, %s615
        %p617 = pneg %p232
        %p618 = pneg %p229
        %p619 = pneg %p260
        %p620 = pneg %p257
        %p621 = scmp.lt.s32.totalorder %s25, 0
        %s622 = scalar_select %p621, %s25, 0
        %p623 = scmp.lt.s32.totalorder %s24, 1
        %s624 = scalar_select %p623, %s24, 1
        %s625 = smul.addr %s622, 2
        %s626 = sadd.s32 %s624, %s625
        %s627 = smul.addr %s626, 8
        %s628 = scalar_lea.vmem %s8, %s627
        %p629 = scmp.lt.s32.totalorder %s25, 0
        %s630 = scalar_select %p629, %s25, 0
        %p631 = scmp.lt.s32.totalorder %s24, 1
        %s632 = scalar_select %p631, %s24, 1
        %s633 = smul.addr %s630, 2
        %s634 = sadd.s32 %s632, %s633
        %s635 = smul.addr %s634, 8
        %s636 = scalar_lea.vmem %s1, %s635
        %p637 = scmp.lt.s32.totalorder %s25, 0
        %s638 = scalar_select %p637, %s25, 0
        %s639 = smul.addr %s638, 8
        %s640 = scalar_lea.vmem %s6, %s639
        %p641 = scmp.lt.s32.totalorder %s25, 0
        %s642 = scalar_select %p641, %s25, 0
        %s643 = smul.addr %s642, 8
        %s644 = scalar_lea.vmem %s7, %s643
        %p645 = scmp.lt.s32.totalorder %s25, 0
        %s646 = scalar_select %p645, %s25, 0
        %p647 = scmp.lt.s32.totalorder %s24, 1
        %s648 = scalar_select %p647, %s24, 1
        %s649 = smul.addr %s646, 2
        %s650 = sadd.s32 %s648, %s649
        %s651 = smul.addr %s650, 8
        %s652 = scalar_lea.vmem %s8, %s651
        %s654 = sld [smem:[#allocation2]]
        %s655 = sld [smem:[#allocation2 + $0x1]]
        %s656 = sld [smem:[#allocation2 + $0x2]]
        %s657 = sld [smem:[#allocation2 + $0x3]]
        %s658 = sld [smem:[#allocation2 + $0x4]]
        %s659 = sld [smem:[#allocation2 + $0x5]]
        %v660 = vld [vmem:[%s640] sm:$0xff]
        %v661 = vpack.c.bf16 %v660, %v660
        %v662 = vld [vmem:[%s644] sm:$0xff]
        %v663 = vpack.c.bf16 %v662, %v662
        %v664 = vld [vmem:[%s545] sm:$0xf]
        %v665 = vld [vmem:[%s545 + $0x4] sm:$0xf]
        %v666 = vld [vmem:[%s545 + $0x8] sm:$0xf]
        %v667 = vld [vmem:[%s552] sm:$0xf]
        %v668 = vld [vmem:[%s552 + $0x4] sm:$0xf]
        %v669 = vld [vmem:[%s552 + $0x8] sm:$0xf]
        %v670 = vld [vmem:[%s559] sm:$0xf]
        %v671 = vld [vmem:[%s559 + $0x4] sm:$0xf]
        %v672 = vld [vmem:[%s566] sm:$0xf]
        %v673 = vld [vmem:[%s566 + $0x4] sm:$0xf]
        %p674 = scmp.le.f32.partialorder %s654, 0.0
        %s675 = scalar_select %p674, 1.0, 0.0
        %v676 = vstv %s675
        %v680 = vunpack.c.l.b16 %v664
        %v681 = vunpack.c.l.b16 %v665
        %v682 = vunpack.c.l.b16 %v666
        %v683 = vpack.c.b16 %v681, %v680
        %v684 = vpack.c.b16 %v682, %v682
        %vm686 = vcmask 195584
        %v688 = vsel %vm686, %v661, 0
        %vm690 = vcmask 1043456
        %v692 = vsel %vm690, %v684, 0
        %694 = vmatprep.subr.bf16.mxu0 0
        %695 = vmatpush1.bf16.msra.mxu0 %v683
        %696 = vmatprep.subr.bf16.mxu0 0
        %697 = vmatpush1.bf16.msra.mxu0 %v692
        %698 = vmatprep.subr.bf16.mxu0 0
        %699 = vmatpush1.bf16.msra.mxu0 0
        %700 = vmatprep.subr.bf16.mxu0 0
        %701 = vmatpush1.bf16.msra.mxu0 0
        %702 = vmatprep.subr.bf16.mxu0 0
        %703 = vmatpush1.bf16.msra.mxu0 0
        %704 = vmatprep.subr.bf16.mxu0 0
        %705 = vmatpush1.bf16.msra.mxu0 0
        %706 = vmatprep.subr.bf16.mxu0 0
        %707 = vmatpush1.bf16.msra.mxu0 0
        %708 = vmatprep.subr.bf16.mxu0 0
        %709 = vmatpush1.bf16.msra.mxu0 0
        %710 = vmatprep.subr.bf16.mxu0 0
        %711 = vmatpush1.bf16.msra.mxu0 0
        %712 = vmatprep.subr.bf16.mxu0 0
        %713 = vmatpush1.bf16.msra.mxu0 0
        %714 = vmatprep.subr.bf16.mxu0 0
        %715 = vmatpush1.bf16.msra.mxu0 0
        %716 = vmatprep.subr.bf16.mxu0 0
        %717 = vmatpush1.bf16.msra.mxu0 0
        %718 = vmatprep.subr.bf16.mxu0 0
        %719 = vmatpush1.bf16.msra.mxu0 0
        %720 = vmatprep.subr.bf16.mxu0 0
        %721 = vmatpush1.bf16.msra.mxu0 0
        %722 = vmatprep.subr.bf16.mxu0 0
        %723 = vmatpush1.bf16.msra.mxu0 0
        %724 = vmatprep.subr.bf16.mxu0 0
        %725 = vmatpush1.bf16.msra.mxu0 0
        %726 = vmatprep.mubr.bf16.mxu0 0
        %727 = vmatmul.mubr.bf16.gmra.mrb[0].mxu0 %v688
        %v728 = vpop.f32.mrb[0].mxu0
        %v729 = vadd.f32 %v676, %v728
        %v730 = vpop.f32.mrb[0].mxu0
        %v731 = vpop.f32.mrb[0].mxu0
        %v732 = vpop.f32.mrb[0].mxu0
        %733 = vdwg.mxu0
        %p734 = scmp.le.f32.partialorder %s655, 0.0
        %s735 = scalar_select %p734, 1.0, 0.0
        %v736 = vstv %s735
        %v739 = vunpack.c.l.b16 %v670
        %v740 = vunpack.c.l.b16 %v671
        %v741 = vpack.c.b16 %v740, %v739
        %vm743 = vcmask 130048
        %v745 = vsel %vm743, %v663, 0
        %747 = vmatprep.subr.bf16.mxu0 0
        %748 = vmatpush1.bf16.msra.mxu0 %v741
        %749 = vmatprep.subr.bf16.mxu0 0
        %750 = vmatpush1.bf16.msra.mxu0 0
        %751 = vmatprep.subr.bf16.mxu0 0
        %752 = vmatpush1.bf16.msra.mxu0 0
        %753 = vmatprep.subr.bf16.mxu0 0
        %754 = vmatpush1.bf16.msra.mxu0 0
        %755 = vmatprep.subr.bf16.mxu0 0
        %756 = vmatpush1.bf16.msra.mxu0 0
        %757 = vmatprep.subr.bf16.mxu0 0
        %758 = vmatpush1.bf16.msra.mxu0 0
        %759 = vmatprep.subr.bf16.mxu0 0
        %760 = vmatpush1.bf16.msra.mxu0 0
        %761 = vmatprep.subr.bf16.mxu0 0
        %762 = vmatpush1.bf16.msra.mxu0 0
        %763 = vmatprep.subr.bf16.mxu0 0
        %764 = vmatpush1.bf16.msra.mxu0 0
        %765 = vmatprep.subr.bf16.mxu0 0
        %766 = vmatpush1.bf16.msra.mxu0 0
        %767 = vmatprep.subr.bf16.mxu0 0
        %768 = vmatpush1.bf16.msra.mxu0 0
        %769 = vmatprep.subr.bf16.mxu0 0
        %770 = vmatpush1.bf16.msra.mxu0 0
        %771 = vmatprep.subr.bf16.mxu0 0
        %772 = vmatpush1.bf16.msra.mxu0 0
        %773 = vmatprep.subr.bf16.mxu0 0
        %774 = vmatpush1.bf16.msra.mxu0 0
        %775 = vmatprep.subr.bf16.mxu0 0
        %776 = vmatpush1.bf16.msra.mxu0 0
        %777 = vmatprep.subr.bf16.mxu0 0
        %778 = vmatpush1.bf16.msra.mxu0 0
        %779 = vmatprep.mubr.bf16.mxu0 0
        %780 = vmatmul.mubr.bf16.gmra.mrb[0].mxu0 %v745
        %v781 = vpop.f32.mrb[0].mxu0
        %v782 = vadd.f32 %v736, %v781
        %v783 = vpop.f32.mrb[0].mxu0
        %v784 = vpop.f32.mrb[0].mxu0
        %v785 = vpop.f32.mrb[0].mxu0
        %786 = vdwg.mxu0
        %p787 = scmp.lt.f32.partialorder %s656, 0.0
        %s788 = scalar_select %p787, 1.0, 0.0
        %v789 = vstv %s788
        %v793 = vunpack.c.l.b16 %v667
        %v794 = vunpack.c.l.b16 %v668
        %v795 = vunpack.c.l.b16 %v669
        %v796 = vpack.c.b16 %v794, %v793
        %v797 = vpack.c.b16 %v795, %v795
        %v800 = vsel %vm690, %v797, 0
        %802 = vmatprep.subr.bf16.mxu0 0
        %803 = vmatpush1.bf16.msra.mxu0 %v796
        %804 = vmatprep.subr.bf16.mxu0 0
        %805 = vmatpush1.bf16.msra.mxu0 %v800
        %806 = vmatprep.subr.bf16.mxu0 0
        %807 = vmatpush1.bf16.msra.mxu0 0
        %808 = vmatprep.subr.bf16.mxu0 0
        %809 = vmatpush1.bf16.msra.mxu0 0
        %810 = vmatprep.subr.bf16.mxu0 0
        %811 = vmatpush1.bf16.msra.mxu0 0
        %812 = vmatprep.subr.bf16.mxu0 0
        %813 = vmatpush1.bf16.msra.mxu0 0
        %814 = vmatprep.subr.bf16.mxu0 0
        %815 = vmatpush1.bf16.msra.mxu0 0
        %816 = vmatprep.subr.bf16.mxu0 0
        %817 = vmatpush1.bf16.msra.mxu0 0
        %818 = vmatprep.subr.bf16.mxu0 0
        %819 = vmatpush1.bf16.msra.mxu0 0
        %820 = vmatprep.subr.bf16.mxu0 0
        %821 = vmatpush1.bf16.msra.mxu0 0
        %822 = vmatprep.subr.bf16.mxu0 0
        %823 = vmatpush1.bf16.msra.mxu0 0
        %824 = vmatprep.subr.bf16.mxu0 0
        %825 = vmatpush1.bf16.msra.mxu0 0
        %826 = vmatprep.subr.bf16.mxu0 0
        %827 = vmatpush1.bf16.msra.mxu0 0
        %828 = vmatprep.subr.bf16.mxu0 0
        %829 = vmatpush1.bf16.msra.mxu0 0
        %830 = vmatprep.subr.bf16.mxu0 0
        %831 = vmatpush1.bf16.msra.mxu0 0
        %832 = vmatprep.subr.bf16.mxu0 0
        %833 = vmatpush1.bf16.msra.mxu0 0
        %834 = vmatprep.mubr.bf16.mxu0 0
        %835 = vmatmul.mubr.bf16.gmra.mrb[0].mxu0 %v688
        %v836 = vpop.f32.mrb[0].mxu0
        %v837 = vadd.f32 %v789, %v836
        %v838 = vpop.f32.mrb[0].mxu0
        %v839 = vpop.f32.mrb[0].mxu0
        %v840 = vpop.f32.mrb[0].mxu0
        %841 = vdwg.mxu0
        %p842 = scmp.lt.f32.partialorder %s657, 0.0
        %s843 = scalar_select %p842, 1.0, 0.0
        %v844 = vstv %s843
        %v847 = vunpack.c.l.b16 %v672
        %v848 = vunpack.c.l.b16 %v673
        %v849 = vpack.c.b16 %v848, %v847
        %851 = vmatprep.subr.bf16.mxu0 0
        %852 = vmatpush1.bf16.msra.mxu0 %v849
        %853 = vmatprep.subr.bf16.mxu0 0
        %854 = vmatpush1.bf16.msra.mxu0 0
        %855 = vmatprep.subr.bf16.mxu0 0
        %856 = vmatpush1.bf16.msra.mxu0 0
        %857 = vmatprep.subr.bf16.mxu0 0
        %858 = vmatpush1.bf16.msra.mxu0 0
        %859 = vmatprep.subr.bf16.mxu0 0
        %860 = vmatpush1.bf16.msra.mxu0 0
        %861 = vmatprep.subr.bf16.mxu0 0
        %862 = vmatpush1.bf16.msra.mxu0 0
        %863 = vmatprep.subr.bf16.mxu0 0
        %864 = vmatpush1.bf16.msra.mxu0 0
        %865 = vmatprep.subr.bf16.mxu0 0
        %866 = vmatpush1.bf16.msra.mxu0 0
        %867 = vmatprep.subr.bf16.mxu0 0
        %868 = vmatpush1.bf16.msra.mxu0 0
        %869 = vmatprep.subr.bf16.mxu0 0
        %870 = vmatpush1.bf16.msra.mxu0 0
        %871 = vmatprep.subr.bf16.mxu0 0
        %872 = vmatpush1.bf16.msra.mxu0 0
        %873 = vmatprep.subr.bf16.mxu0 0
        %874 = vmatpush1.bf16.msra.mxu0 0
        %875 = vmatprep.subr.bf16.mxu0 0
        %876 = vmatpush1.bf16.msra.mxu0 0
        %877 = vmatprep.subr.bf16.mxu0 0
        %878 = vmatpush1.bf16.msra.mxu0 0
        %879 = vmatprep.subr.bf16.mxu0 0
        %880 = vmatpush1.bf16.msra.mxu0 0
        %881 = vmatprep.subr.bf16.mxu0 0
        %882 = vmatpush1.bf16.msra.mxu0 0
        %883 = vmatprep.mubr.bf16.mxu0 0
        %884 = vmatmul.mubr.bf16.gmra.mrb[0].mxu0 %v745
        %v885 = vpop.f32.mrb[0].mxu0
        %v886 = vadd.f32 %v844, %v885
        %v887 = vpop.f32.mrb[0].mxu0
        %v888 = vpop.f32.mrb[0].mxu0
        %v889 = vpop.f32.mrb[0].mxu0
        %890 = vdwg.mxu0
        %vm891 = vcmp.eq.f32.partialorder %v729, 0.0
        %vm892 = vcmp.eq.f32.partialorder %v782, 0.0
        %vm893 = vmand %vm891, %vm892
        %vm894 = vcmp.gt.f32.partialorder %v837, 0.0
        %vm895 = vcmp.gt.f32.partialorder %v886, 0.0
        %vm896 = vmor %vm894, %vm895
        %s897 = ssub.f32 0.0, %s658
        %v898 = vstv %s659
        %v899 = vsel %vm896, %v898, 0.0
        %v900 = vstv %s897
        %v901 = vsel %vm893, %v900, %v899
        %v902 = vld [vmem:[%s636] sm:$0xff]
        %v903 = vadd.f32 %v902, %v901
        %904 = vst [vmem:[%s652] sm:$0xff] %v903
        %p905 = scmp.lt.s32.totalorder %s25, 0
        %s906 = scalar_select %p905, %s25, 0
        %p907 = scmp.lt.s32.totalorder %s24, 1
        %s908 = scalar_select %p907, %s24, 1
        %s909 = smul.addr %s906, 2
        %s910 = sadd.s32 %s908, %s909
        %s911 = smul.addr %s910, 8
        %s912 = scalar_lea.vmem %s8, %s911
        // Predicated region
        $region221: #{causality_review.1} parent=199 // pred_check
          %p913 = pneg %p257
        $region222: #{causality_review.1} parent=199 // pred_check_branch
          %915 = sbr.rel (%p913) target = $region224
        $region223: #{causality_review.1} parent=199 // pred_region
          _
        $region224: #{causality_review.1} parent=199 // pred_fallthru
          _
      $region200: #{causality_review.1} parent=5 // pred_fallthru
        _
      %p916 = scmp.le.s32.totalorder 2, %s15
      // Predicated region
      $region225: #{causality_review.1} parent=5 // pred_check
        %p917 = pneg %p916
      $region226: #{causality_review.1} parent=5 // pred_check_branch
        %919 = sbr.rel (%p917) target = $region228
      $region227: #{causality_review.1} parent=5 // pred_region
        %s920 = ssub.s32 %s15, 2
        // Predicated region
        $region229: #{causality_review.1} parent=227 // pred_check
          %p921 = pneg %p263
        $region230: #{causality_review.1} parent=227 // pred_check_branch
          %923 = sbr.rel (%p921) target = $region232
        $region231: #{causality_review.1} parent=227 // pred_region
          %p924 = scmp.lt.s32.totalorder %s27, 0
          %s925 = scalar_select %p924, %s27, 0
          %p926 = scmp.lt.s32.totalorder %s26, 1
          %s927 = scalar_select %p926, %s26, 1
          %s928 = smul.addr %s925, 2
          %s929 = sadd.s32 %s927, %s928
          %s930 = smul.addr %s929, 8
          %s931 = scalar_lea.vmem %s8, %s930
        $region232: #{causality_review.1} parent=227 // pred_fallthru
          _
      $region228: #{causality_review.1} parent=5 // pred_fallthru
        _
    $region6: #{causality_review.1} parent=1 // loop_footer
      %s19 = sadd.s32 1, %s15
    $region7: #{causality_review.1} parent=1 // loop_footer_branch
      %14 = sbr.rel target = $region3
    $region8: #{causality_review.1} parent=1 // loop_exit
      _
    %932 = vsyncpa [#allocation3], 1
    %s933 = scalar_lea.sflag [#allocation3], 1
    %934 = vsyncpa %s933, 1

</llo_original>
